<compile_context>
chip_gen: v5e
topology: v5e:2x2
jax: 0.10.0
libtpu: 0.0.40
codegen_flags: <defaults>
</compile_context>

<pallas_src>
import functools

import numpy as np
import jax
import jax.numpy as jnp
from jax import lax
from jax.experimental import pallas as pl
from jax.experimental.pallas import tpu as pltpu

N_EMBED = 256      # matches module's n_embed
HEAD_SIZE = 32
BATCH = 2
SEQ = 8            # T <= block_size (768); causal mask built per (B, T)


def attention_head_kernel(x_ref, wq_ref, wk_ref, wv_ref, bias_ref, o_ref, *,
                          scale):
    # x_ref: (B*T, C); w*_ref: (C, H); bias_ref: (B*T, B*T) additive mask;
    # o_ref: (B*T, H).  scale = head_size ** -0.5 (trace-time constant).
    x = x_ref[...]                                                 # (B*T, C)

    # Three small MXU pushes (N=32 each) — avoids intra-tile slicing of a
    # fused qkv result and any per-call weight preprocessing.
    q = jnp.dot(x, wq_ref[...], preferred_element_type=jnp.float32)
    k = jnp.dot(x, wk_ref[...], preferred_element_type=jnp.float32)
    v = jnp.dot(x, wv_ref[...], preferred_element_type=jnp.float32)

    # scores = q @ k^T, contracting over H without materializing k.T.
    scores = lax.dot_general(
        q, k,
        dimension_numbers=(((1,), (1,)), ((), ())),
        preferred_element_type=jnp.float32)                        # (B*T, B*T)

    # Scale (matches PyTorch's `affinity * head_size**-0.5` order) and add the
    # precomputed block-diagonal-causal bias (0 keep / -1e30 drop).
    scores = scores * scale + bias_ref[...]

    # Numerically stable softmax over the last axis; exact division (kernel is
    # latency-bound, approx reciprocal bought nothing and cost fidelity).
    m = jnp.max(scores, axis=-1, keepdims=True)
    p = jnp.exp(scores - m)
    denom = jnp.sum(p, axis=-1, keepdims=True)
    att = p / denom

    out = jnp.dot(att, v, preferred_element_type=jnp.float32)      # (B*T, H)
    o_ref[...] = out.astype(o_ref.dtype)


@functools.lru_cache(maxsize=None)
def _block_causal_bias(batch, seq):
    """Additive mask for the flattened (B*T, B*T) score matrix.

    0 where key is in the same batch element AND key position <= query
    position, -1e30 elsewhere.  Built once per (batch, seq) with numpy at
    trace/init time — zero per-call cost, NaN-robust (no -inf).
    """
    n = batch * seq
    row = np.arange(n)[:, None]
    col = np.arange(n)[None, :]
    keep = ((row // seq) == (col // seq)) & (col <= row)
    return jnp.asarray(np.where(keep, 0.0, -1e30).astype(np.float32))


def attention_head(x, wq, wk, wv):
    B, T, C = x.shape
    H = wq.shape[-1]
    n = B * T

    x2d = x.reshape(n, C)                    # free view: batch -> sublane dim
    bias = _block_causal_bias(B, T)          # cached, built once per shape
    scale = float(H) ** -0.5

    out2d = pl.pallas_call(
        functools.partial(attention_head_kernel, scale=scale),
        out_shape=jax.ShapeDtypeStruct((n, H), x.dtype),
        grid_spec=pltpu.PrefetchScalarGridSpec(
            num_scalar_prefetch=0,
            grid=(1,),                       # single invocation, whole problem
            in_specs=[
                pl.BlockSpec((n, C), lambda i: (0, 0)),
                pl.BlockSpec((C, H), lambda i: (0, 0)),
                pl.BlockSpec((C, H), lambda i: (0, 0)),
                pl.BlockSpec((C, H), lambda i: (0, 0)),
                pl.BlockSpec((n, n), lambda i: (0, 0)),
            ],
            out_specs=pl.BlockSpec((n, H), lambda i: (0, 0)),
        ),
        compiler_params=pltpu.CompilerParams(
            dimension_semantics=("arbitrary",)),
    )(x2d, wq, wk, wv, bias)

    return out2d.reshape(B, T, H)


def reference(x, wq, wk, wv):
    hp = jax.lax.Precision.HIGHEST
    q = jnp.matmul(x, wq, precision=hp)
    k = jnp.matmul(x, wk, precision=hp)
    v = jnp.matmul(x, wv, precision=hp)
    scores = jnp.matmul(q, jnp.swapaxes(k, -2, -1), precision=hp)
    scores = scores * (wq.shape[-1] ** -0.5)
    T = x.shape[1]
    mask = jnp.tril(jnp.ones((T, T), dtype=bool))
    scores = jnp.where(mask, scores, -jnp.inf)
    att = jax.nn.softmax(scores, axis=-1)
    return jnp.matmul(att, v, precision=hp)


if __name__ == "__main__":
    key = jax.random.PRNGKey(0)
    kx, kq, kk, kv = jax.random.split(key, 4)

    x = jax.random.normal(kx, (BATCH, SEQ, N_EMBED), dtype=jnp.float32)
    # deterministic "init" of the linear layers (bias=False), stored as (C, H)
    wq = jax.random.normal(kq, (N_EMBED, HEAD_SIZE), dtype=jnp.float32) * 0.02
    wk = jax.random.normal(kk, (N_EMBED, HEAD_SIZE), dtype=jnp.float32) * 0.02
    wv = jax.random.normal(kv, (N_EMBED, HEAD_SIZE), dtype=jnp.float32) * 0.02

    out = jax.block_until_ready(attention_head(x, wq, wk, wv))
    ref = reference(x, wq, wk, wv)

    assert out.shape == (BATCH, SEQ, HEAD_SIZE)
    # Exact softmax division restored (no approx reciprocal); remaining
    # tolerance only covers f32-matmul pass-decomposition differences between
    # the Mosaic kernel and the XLA reference (typically <1e-5).
    max_err = float(jnp.max(jnp.abs(out - ref)))
    assert jnp.allclose(out, ref, atol=1e-3, rtol=1e-3), max_err
    print("KERNEL_OK")
</pallas_src>

<mosaic_0001>
module attributes {stable_mosaic.version = 11 : i64} {
  func.func @attention_head_kernel(%arg0: i32, %arg1: memref<16x256xf32, #tpu.memory_space<vmem>>, %arg2: memref<256x32xf32, #tpu.memory_space<vmem>>, %arg3: memref<256x32xf32, #tpu.memory_space<vmem>>, %arg4: memref<256x32xf32, #tpu.memory_space<vmem>>, %arg5: memref<16x16xf32, #tpu.memory_space<vmem>>, %arg6: memref<16x32xf32, #tpu.memory_space<vmem>>) attributes {dimension_semantics = [#tpu.dimension_semantics<arbitrary>], iteration_bounds = array<i64: 1>, scalar_prefetch = 0 : i64, scratch_operands = 0 : i64, tpu.core_type = #tpu.core_type<tc>, window_params = [{pipeline_mode = #tpu.pipeline_mode<synchronous>, transform_indices = @transform_0, window_bounds = array<i64: 16, 256>}, {pipeline_mode = #tpu.pipeline_mode<synchronous>, transform_indices = @transform_1, window_bounds = array<i64: 256, 32>}, {pipeline_mode = #tpu.pipeline_mode<synchronous>, transform_indices = @transform_2, window_bounds = array<i64: 256, 32>}, {pipeline_mode = #tpu.pipeline_mode<synchronous>, transform_indices = @transform_3, window_bounds = array<i64: 256, 32>}, {pipeline_mode = #tpu.pipeline_mode<synchronous>, transform_indices = @transform_4, window_bounds = array<i64: 16, 16>}, {pipeline_mode = #tpu.pipeline_mode<synchronous>, transform_indices = @transform_5, window_bounds = array<i64: 16, 32>}]} {
    %c0 = arith.constant 0 : index
    %c0_0 = arith.constant 0 : index
    %0 = vector.load %arg1[%c0, %c0_0] : memref<16x256xf32, #tpu.memory_space<vmem>>, vector<16x256xf32>
    %c0_1 = arith.constant 0 : index
    %c0_2 = arith.constant 0 : index
    %1 = vector.load %arg2[%c0_1, %c0_2] : memref<256x32xf32, #tpu.memory_space<vmem>>, vector<256x32xf32>
    %cst = arith.constant dense<0.000000e+00> : vector<16x32xf32>
    %2 = tpu.matmul %0, %1, %cst {dimension_numbers = #tpu.dot_dimension_numbers<[1], [0], [0], [1], [0, 0, 1, 1], [], []>} : vector<16x256xf32>, vector<256x32xf32>, vector<16x32xf32> -> vector<16x32xf32>
    %c0_3 = arith.constant 0 : index
    %c0_4 = arith.constant 0 : index
    %3 = vector.load %arg3[%c0_3, %c0_4] : memref<256x32xf32, #tpu.memory_space<vmem>>, vector<256x32xf32>
    %cst_5 = arith.constant dense<0.000000e+00> : vector<16x32xf32>
    %4 = tpu.matmul %0, %3, %cst_5 {dimension_numbers = #tpu.dot_dimension_numbers<[1], [0], [0], [1], [0, 0, 1, 1], [], []>} : vector<16x256xf32>, vector<256x32xf32>, vector<16x32xf32> -> vector<16x32xf32>
    %c0_6 = arith.constant 0 : index
    %c0_7 = arith.constant 0 : index
    %5 = vector.load %arg4[%c0_6, %c0_7] : memref<256x32xf32, #tpu.memory_space<vmem>>, vector<256x32xf32>
    %cst_8 = arith.constant dense<0.000000e+00> : vector<16x32xf32>
    %6 = tpu.matmul %0, %5, %cst_8 {dimension_numbers = #tpu.dot_dimension_numbers<[1], [0], [0], [1], [0, 0, 1, 1], [], []>} : vector<16x256xf32>, vector<256x32xf32>, vector<16x32xf32> -> vector<16x32xf32>
    %cst_9 = arith.constant dense<0.000000e+00> : vector<16x16xf32>
    %7 = tpu.matmul %2, %4, %cst_9 {dimension_numbers = #tpu.dot_dimension_numbers<[1], [1], [0], [0], [0, 0, 1, 0], [], []>} : vector<16x32xf32>, vector<16x32xf32>, vector<16x16xf32> -> vector<16x16xf32>
    %cst_10 = arith.constant 0.176776692 : f32
    %8 = vector.broadcast %cst_10 : f32 to vector<16x16xf32>
    %9 = arith.mulf %7, %8 : vector<16x16xf32>
    %c0_11 = arith.constant 0 : index
    %c0_12 = arith.constant 0 : index
    %10 = vector.load %arg5[%c0_11, %c0_12] : memref<16x16xf32, #tpu.memory_space<vmem>>, vector<16x16xf32>
    %11 = arith.addf %9, %10 : vector<16x16xf32>
    %cst_13 = arith.constant dense<0xFF800000> : vector<16xf32>
    %12 = vector.multi_reduction <maximumf>, %11, %cst_13 [1] : vector<16x16xf32> to vector<16xf32>
    %13 = vector.shape_cast %12 : vector<16xf32> to vector<16x1xf32>
    %14 = vector.broadcast %13 : vector<16x1xf32> to vector<16x16xf32>
    %15 = arith.subf %11, %14 : vector<16x16xf32>
    %16 = math.exp %15 : vector<16x16xf32>
    %cst_14 = arith.constant dense<0.000000e+00> : vector<16xf32>
    %17 = vector.multi_reduction <add>, %16, %cst_14 [1] : vector<16x16xf32> to vector<16xf32>
    %18 = vector.shape_cast %17 : vector<16xf32> to vector<16x1xf32>
    %19 = vector.broadcast %18 : vector<16x1xf32> to vector<16x16xf32>
    %20 = arith.divf %16, %19 : vector<16x16xf32>
    %cst_15 = arith.constant dense<0.000000e+00> : vector<16x32xf32>
    %21 = tpu.matmul %20, %6, %cst_15 {dimension_numbers = #tpu.dot_dimension_numbers<[1], [0], [0], [1], [0, 0, 1, 1], [], []>} : vector<16x16xf32>, vector<16x32xf32>, vector<16x32xf32> -> vector<16x32xf32>
    %c0_16 = arith.constant 0 : index
    %c0_17 = arith.constant 0 : index
    %22 = vector.load %arg6[%c0_16, %c0_17] : memref<16x32xf32, #tpu.memory_space<vmem>>, vector<16x32xf32>
    tpu.vector_store %arg6[%c0_16, %c0_17], %21 {strides = array<i32>} : memref<16x32xf32, #tpu.memory_space<vmem>>, vector<16x32xf32>,
    return
  }
  func.func @transform_0(%arg0: i32) -> (i32, i32) {
    %c0_i32 = arith.constant 0 : i32
    %c0_i32_0 = arith.constant 0 : i32
    %c0_i32_1 = arith.constant 0 : i32
    return %c0_i32, %c0_i32_0 : i32, i32
  }
  func.func @transform_1(%arg0: i32) -> (i32, i32) {
    %c0_i32 = arith.constant 0 : i32
    %c0_i32_0 = arith.constant 0 : i32
    %c0_i32_1 = arith.constant 0 : i32
    return %c0_i32, %c0_i32_0 : i32, i32
  }
  func.func @transform_2(%arg0: i32) -> (i32, i32) {
    %c0_i32 = arith.constant 0 : i32
    %c0_i32_0 = arith.constant 0 : i32
    %c0_i32_1 = arith.constant 0 : i32
    return %c0_i32, %c0_i32_0 : i32, i32
  }
  func.func @transform_3(%arg0: i32) -> (i32, i32) {
    %c0_i32 = arith.constant 0 : i32
    %c0_i32_0 = arith.constant 0 : i32
    %c0_i32_1 = arith.constant 0 : i32
    return %c0_i32, %c0_i32_0 : i32, i32
  }
  func.func @transform_4(%arg0: i32) -> (i32, i32) {
    %c0_i32 = arith.constant 0 : i32
    %c0_i32_0 = arith.constant 0 : i32
    %c0_i32_1 = arith.constant 0 : i32
    return %c0_i32, %c0_i32_0 : i32, i32
  }
  func.func @transform_5(%arg0: i32) -> (i32, i32) {
    %c0_i32 = arith.constant 0 : i32
    %c0_i32_0 = arith.constant 0 : i32
    %c0_i32_1 = arith.constant 0 : i32
    return %c0_i32, %c0_i32_0 : i32, i32
  }
}

</mosaic_0001>

<llo_original>
// kernel: tpu_custom_call.1
$region0: #{tpu_custom_call.1}
  #allocation0 [shape = 'u32[]', space=smem, size = 0x4, offset = 0x4, fixed_abs, tag = 'smem constant byte address 0x4 - core index']
  #allocation1 [shape = 'u32[72,128]{1,0:T(1,128)}', space=vmem, size = 0x9000, scoped, tag = 'internal scratch']
  %s0 = inlined_call_operand.vmem [shape: f32[16,256], index: 0, kind: input, shape index: {}]
  %s1 = inlined_call_operand.vmem [shape: f32[256,32], index: 1, kind: input, shape index: {}]
  %s2 = inlined_call_operand.vmem [shape: f32[256,32], index: 2, kind: input, shape index: {}]
  %s3 = inlined_call_operand.vmem [shape: f32[256,32], index: 3, kind: input, shape index: {}]
  %s4 = inlined_call_operand.vmem [shape: f32[16,16], index: 4, kind: input, shape index: {}]
  %s5 = inlined_call_operand.hbm [shape: f32[16,32], index: 5, kind: output, shape index: {}]
  %s6 = sld [smem:[#allocation0]]
  $region30: #{tpu_custom_call.1} parent=0
    _
  %s8 = ssub.s32 1, %s6
  %s9 = scalar_select 0, %s8, %s6
  $region1: #{tpu_custom_call.1} parent=0
    #allocation2 [shape = 'u8[8192]{0}', space=vmem, size = 0x2000, scoped, tag = 'output window, operand 0, single buffered']
    #allocation3 [shape = 's32[1]{0}', space=sflag, size = 0x4, scoped, tag = 'scoped memory for tpu_custom_call.1']
    %10 = vsyncpa [#allocation3], 0
    // Predicated region
    $region2: #{tpu_custom_call.1} parent=1 // pred_check
      _
    $region3: #{tpu_custom_call.1} parent=1 // pred_check_branch
      %12 = sbr.rel (0) target = $region5
    $region4: #{tpu_custom_call.1} parent=1 // pred_region
      _
    $region5: #{tpu_custom_call.1} parent=1 // pred_fallthru
      _
    // Predicated region
    $region6: #{tpu_custom_call.1} parent=1 // pred_check
      _
    $region7: #{tpu_custom_call.1} parent=1 // pred_check_branch
      %14 = sbr.rel (0) target = $region9
    $region8: #{tpu_custom_call.1} parent=1 // pred_region
      _
    $region9: #{tpu_custom_call.1} parent=1 // pred_fallthru
      _
    // Predicated region
    $region10: #{tpu_custom_call.1} parent=1 // pred_check
      _
    $region11: #{tpu_custom_call.1} parent=1 // pred_check_branch
      %16 = sbr.rel (0) target = $region13
    $region12: #{tpu_custom_call.1} parent=1 // pred_region
      _
    $region13: #{tpu_custom_call.1} parent=1 // pred_fallthru
      _
    // Predicated region
    $region14: #{tpu_custom_call.1} parent=1 // pred_check
      _
    $region15: #{tpu_custom_call.1} parent=1 // pred_check_branch
      %18 = sbr.rel (0) target = $region17
    $region16: #{tpu_custom_call.1} parent=1 // pred_region
      _
    $region17: #{tpu_custom_call.1} parent=1 // pred_fallthru
      _
    // Predicated region
    $region18: #{tpu_custom_call.1} parent=1 // pred_check
      _
    $region19: #{tpu_custom_call.1} parent=1 // pred_check_branch
      %20 = sbr.rel (0) target = $region21
    $region20: #{tpu_custom_call.1} parent=1 // pred_region
      _
    $region21: #{tpu_custom_call.1} parent=1 // pred_fallthru
      _
    %v21 = vld [vmem:[%s0] sm:$0xff]
    %v22 = vld [vmem:[%s0 + $0x8] sm:$0xff]
    %v23 = vld [vmem:[%s0 + $0x10] sm:$0xff]
    %v24 = vld [vmem:[%s0 + $0x18] sm:$0xff]
    %v25 = vld [vmem:[%s1] sm:$0xff]
    %v26 = vld [vmem:[%s1 + $0x8] sm:$0xff]
    %v27 = vld [vmem:[%s1 + $0x10] sm:$0xff]
    %v28 = vld [vmem:[%s1 + $0x18] sm:$0xff]
    %v29 = vld [vmem:[%s1 + $0x20] sm:$0xff]
    %v30 = vld [vmem:[%s1 + $0x28] sm:$0xff]
    %v31 = vld [vmem:[%s1 + $0x30] sm:$0xff]
    %v32 = vld [vmem:[%s1 + $0x38] sm:$0xff]
    %v33 = vld [vmem:[%s1 + $0x40] sm:$0xff]
    %v34 = vld [vmem:[%s1 + $0x48] sm:$0xff]
    %v35 = vld [vmem:[%s1 + $0x50] sm:$0xff]
    %v36 = vld [vmem:[%s1 + $0x58] sm:$0xff]
    %v37 = vld [vmem:[%s1 + $0x60] sm:$0xff]
    %v38 = vld [vmem:[%s1 + $0x68] sm:$0xff]
    %v39 = vld [vmem:[%s1 + $0x70] sm:$0xff]
    %v40 = vld [vmem:[%s1 + $0x78] sm:$0xff]
    %v41 = vld [vmem:[%s1 + $0x80] sm:$0xff]
    %v42 = vld [vmem:[%s1 + $0x88] sm:$0xff]
    %v43 = vld [vmem:[%s1 + $0x90] sm:$0xff]
    %v44 = vld [vmem:[%s1 + $0x98] sm:$0xff]
    %v45 = vld [vmem:[%s1 + $0xa0] sm:$0xff]
    %v46 = vld [vmem:[%s1 + $0xa8] sm:$0xff]
    %v47 = vld [vmem:[%s1 + $0xb0] sm:$0xff]
    %v48 = vld [vmem:[%s1 + $0xb8] sm:$0xff]
    %v49 = vld [vmem:[%s1 + $0xc0] sm:$0xff]
    %v50 = vld [vmem:[%s1 + $0xc8] sm:$0xff]
    %v51 = vld [vmem:[%s1 + $0xd0] sm:$0xff]
    %v52 = vld [vmem:[%s1 + $0xd8] sm:$0xff]
    %v53 = vld [vmem:[%s1 + $0xe0] sm:$0xff]
    %v54 = vld [vmem:[%s1 + $0xe8] sm:$0xff]
    %v55 = vld [vmem:[%s1 + $0xf0] sm:$0xff]
    %v56 = vld [vmem:[%s1 + $0xf8] sm:$0xff]
    %57 = vmatpush.msra.mxu0 %v40
    %58 = vmatpush.msra.mxu0 %v39
    %59 = vmatpush.msra.mxu0 %v38
    %60 = vmatpush.msra.mxu0 %v37
    %61 = vmatpush.msra.mxu0 %v36
    %62 = vmatpush.msra.mxu0 %v35
    %63 = vmatpush.msra.mxu0 %v34
    %64 = vmatpush.msra.mxu0 %v33
    %65 = vmatpush.msra.mxu0 %v32
    %66 = vmatpush.msra.mxu0 %v31
    %67 = vmatpush.msra.mxu0 %v30
    %68 = vmatpush.msra.mxu0 %v29
    %69 = vmatpush.msra.mxu0 %v28
    %70 = vmatpush.msra.mxu0 %v27
    %71 = vmatpush.msra.mxu0 %v26
    %72 = vmatpush.msra.mxu0 %v25
    %73 = vmatmul.f32.gmra.mxu0 %v21
    %v74 = vpop.f32.mrf.mxu0
    %v75 = vadd.f32 0.0, %v74
    %76 = vmatmul.f32.gmra.mxu0 %v23
    %v77 = vpop.f32.mrf.mxu0
    %v78 = vadd.f32 0.0, %v77
    %79 = vdwg.mxu0
    %80 = vmatpush.msra.mxu0 %v56
    %81 = vmatpush.msra.mxu0 %v55
    %82 = vmatpush.msra.mxu0 %v54
    %83 = vmatpush.msra.mxu0 %v53
    %84 = vmatpush.msra.mxu0 %v52
    %85 = vmatpush.msra.mxu0 %v51
    %86 = vmatpush.msra.mxu0 %v50
    %87 = vmatpush.msra.mxu0 %v49
    %88 = vmatpush.msra.mxu0 %v48
    %89 = vmatpush.msra.mxu0 %v47
    %90 = vmatpush.msra.mxu0 %v46
    %91 = vmatpush.msra.mxu0 %v45
    %92 = vmatpush.msra.mxu0 %v44
    %93 = vmatpush.msra.mxu0 %v43
    %94 = vmatpush.msra.mxu0 %v42
    %95 = vmatpush.msra.mxu0 %v41
    %96 = vmatmul.f32.gmra.mxu0 %v22
    %v97 = vpop.f32.mrf.mxu0
    %v98 = vadd.f32 %v75, %v97
    %99 = vmatmul.f32.gmra.mxu0 %v24
    %v100 = vpop.f32.mrf.mxu0
    %v101 = vadd.f32 %v78, %v100
    %102 = vdwg.mxu0
    %v103 = vld [vmem:[%s2] sm:$0xff]
    %v104 = vld [vmem:[%s2 + $0x8] sm:$0xff]
    %v105 = vld [vmem:[%s2 + $0x10] sm:$0xff]
    %v106 = vld [vmem:[%s2 + $0x18] sm:$0xff]
    %v107 = vld [vmem:[%s2 + $0x20] sm:$0xff]
    %v108 = vld [vmem:[%s2 + $0x28] sm:$0xff]
    %v109 = vld [vmem:[%s2 + $0x30] sm:$0xff]
    %v110 = vld [vmem:[%s2 + $0x38] sm:$0xff]
    %v111 = vld [vmem:[%s2 + $0x40] sm:$0xff]
    %v112 = vld [vmem:[%s2 + $0x48] sm:$0xff]
    %v113 = vld [vmem:[%s2 + $0x50] sm:$0xff]
    %v114 = vld [vmem:[%s2 + $0x58] sm:$0xff]
    %v115 = vld [vmem:[%s2 + $0x60] sm:$0xff]
    %v116 = vld [vmem:[%s2 + $0x68] sm:$0xff]
    %v117 = vld [vmem:[%s2 + $0x70] sm:$0xff]
    %v118 = vld [vmem:[%s2 + $0x78] sm:$0xff]
    %v119 = vld [vmem:[%s2 + $0x80] sm:$0xff]
    %v120 = vld [vmem:[%s2 + $0x88] sm:$0xff]
    %v121 = vld [vmem:[%s2 + $0x90] sm:$0xff]
    %v122 = vld [vmem:[%s2 + $0x98] sm:$0xff]
    %v123 = vld [vmem:[%s2 + $0xa0] sm:$0xff]
    %v124 = vld [vmem:[%s2 + $0xa8] sm:$0xff]
    %v125 = vld [vmem:[%s2 + $0xb0] sm:$0xff]
    %v126 = vld [vmem:[%s2 + $0xb8] sm:$0xff]
    %v127 = vld [vmem:[%s2 + $0xc0] sm:$0xff]
    %v128 = vld [vmem:[%s2 + $0xc8] sm:$0xff]
    %v129 = vld [vmem:[%s2 + $0xd0] sm:$0xff]
    %v130 = vld [vmem:[%s2 + $0xd8] sm:$0xff]
    %v131 = vld [vmem:[%s2 + $0xe0] sm:$0xff]
    %v132 = vld [vmem:[%s2 + $0xe8] sm:$0xff]
    %v133 = vld [vmem:[%s2 + $0xf0] sm:$0xff]
    %v134 = vld [vmem:[%s2 + $0xf8] sm:$0xff]
    %135 = vmatpush.msra.mxu0 %v118
    %136 = vmatpush.msra.mxu0 %v117
    %137 = vmatpush.msra.mxu0 %v116
    %138 = vmatpush.msra.mxu0 %v115
    %139 = vmatpush.msra.mxu0 %v114
    %140 = vmatpush.msra.mxu0 %v113
    %141 = vmatpush.msra.mxu0 %v112
    %142 = vmatpush.msra.mxu0 %v111
    %143 = vmatpush.msra.mxu0 %v110
    %144 = vmatpush.msra.mxu0 %v109
    %145 = vmatpush.msra.mxu0 %v108
    %146 = vmatpush.msra.mxu0 %v107
    %147 = vmatpush.msra.mxu0 %v106
    %148 = vmatpush.msra.mxu0 %v105
    %149 = vmatpush.msra.mxu0 %v104
    %150 = vmatpush.msra.mxu0 %v103
    %151 = vmatmul.f32.gmra.mxu0 %v21
    %v152 = vpop.f32.mrf.mxu0
    %v153 = vadd.f32 0.0, %v152
    %154 = vmatmul.f32.gmra.mxu0 %v23
    %v155 = vpop.f32.mrf.mxu0
    %v156 = vadd.f32 0.0, %v155
    %157 = vdwg.mxu0
    %158 = vmatpush.msra.mxu0 %v134
    %159 = vmatpush.msra.mxu0 %v133
    %160 = vmatpush.msra.mxu0 %v132
    %161 = vmatpush.msra.mxu0 %v131
    %162 = vmatpush.msra.mxu0 %v130
    %163 = vmatpush.msra.mxu0 %v129
    %164 = vmatpush.msra.mxu0 %v128
    %165 = vmatpush.msra.mxu0 %v127
    %166 = vmatpush.msra.mxu0 %v126
    %167 = vmatpush.msra.mxu0 %v125
    %168 = vmatpush.msra.mxu0 %v124
    %169 = vmatpush.msra.mxu0 %v123
    %170 = vmatpush.msra.mxu0 %v122
    %171 = vmatpush.msra.mxu0 %v121
    %172 = vmatpush.msra.mxu0 %v120
    %173 = vmatpush.msra.mxu0 %v119
    %174 = vmatmul.f32.gmra.mxu0 %v22
    %v175 = vpop.f32.mrf.mxu0
    %v176 = vadd.f32 %v153, %v175
    %177 = vmatmul.f32.gmra.mxu0 %v24
    %v178 = vpop.f32.mrf.mxu0
    %v179 = vadd.f32 %v156, %v178
    %180 = vdwg.mxu0
    %v181 = vld [vmem:[%s3] sm:$0xff]
    %v182 = vld [vmem:[%s3 + $0x8] sm:$0xff]
    %v183 = vld [vmem:[%s3 + $0x10] sm:$0xff]
    %v184 = vld [vmem:[%s3 + $0x18] sm:$0xff]
    %v185 = vld [vmem:[%s3 + $0x20] sm:$0xff]
    %v186 = vld [vmem:[%s3 + $0x28] sm:$0xff]
    %v187 = vld [vmem:[%s3 + $0x30] sm:$0xff]
    %v188 = vld [vmem:[%s3 + $0x38] sm:$0xff]
    %v189 = vld [vmem:[%s3 + $0x40] sm:$0xff]
    %v190 = vld [vmem:[%s3 + $0x48] sm:$0xff]
    %v191 = vld [vmem:[%s3 + $0x50] sm:$0xff]
    %v192 = vld [vmem:[%s3 + $0x58] sm:$0xff]
    %v193 = vld [vmem:[%s3 + $0x60] sm:$0xff]
    %v194 = vld [vmem:[%s3 + $0x68] sm:$0xff]
    %v195 = vld [vmem:[%s3 + $0x70] sm:$0xff]
    %v196 = vld [vmem:[%s3 + $0x78] sm:$0xff]
    %v197 = vld [vmem:[%s3 + $0x80] sm:$0xff]
    %v198 = vld [vmem:[%s3 + $0x88] sm:$0xff]
    %v199 = vld [vmem:[%s3 + $0x90] sm:$0xff]
    %v200 = vld [vmem:[%s3 + $0x98] sm:$0xff]
    %v201 = vld [vmem:[%s3 + $0xa0] sm:$0xff]
    %v202 = vld [vmem:[%s3 + $0xa8] sm:$0xff]
    %v203 = vld [vmem:[%s3 + $0xb0] sm:$0xff]
    %v204 = vld [vmem:[%s3 + $0xb8] sm:$0xff]
    %v205 = vld [vmem:[%s3 + $0xc0] sm:$0xff]
    %v206 = vld [vmem:[%s3 + $0xc8] sm:$0xff]
    %v207 = vld [vmem:[%s3 + $0xd0] sm:$0xff]
    %v208 = vld [vmem:[%s3 + $0xd8] sm:$0xff]
    %v209 = vld [vmem:[%s3 + $0xe0] sm:$0xff]
    %v210 = vld [vmem:[%s3 + $0xe8] sm:$0xff]
    %v211 = vld [vmem:[%s3 + $0xf0] sm:$0xff]
    %v212 = vld [vmem:[%s3 + $0xf8] sm:$0xff]
    %213 = vmatpush.msra.mxu0 %v196
    %214 = vmatpush.msra.mxu0 %v195
    %215 = vmatpush.msra.mxu0 %v194
    %216 = vmatpush.msra.mxu0 %v193
    %217 = vmatpush.msra.mxu0 %v192
    %218 = vmatpush.msra.mxu0 %v191
    %219 = vmatpush.msra.mxu0 %v190
    %220 = vmatpush.msra.mxu0 %v189
    %221 = vmatpush.msra.mxu0 %v188
    %222 = vmatpush.msra.mxu0 %v187
    %223 = vmatpush.msra.mxu0 %v186
    %224 = vmatpush.msra.mxu0 %v185
    %225 = vmatpush.msra.mxu0 %v184
    %226 = vmatpush.msra.mxu0 %v183
    %227 = vmatpush.msra.mxu0 %v182
    %228 = vmatpush.msra.mxu0 %v181
    %229 = vmatmul.f32.gmra.mxu0 %v21
    %v230 = vpop.f32.mrf.mxu0
    %v231 = vadd.f32 0.0, %v230
    %232 = vmatmul.f32.gmra.mxu0 %v23
    %v233 = vpop.f32.mrf.mxu0
    %v234 = vadd.f32 0.0, %v233
    %235 = vdwg.mxu0
    %236 = vmatpush.msra.mxu0 %v212
    %237 = vmatpush.msra.mxu0 %v211
    %238 = vmatpush.msra.mxu0 %v210
    %239 = vmatpush.msra.mxu0 %v209
    %240 = vmatpush.msra.mxu0 %v208
    %241 = vmatpush.msra.mxu0 %v207
    %242 = vmatpush.msra.mxu0 %v206
    %243 = vmatpush.msra.mxu0 %v205
    %244 = vmatpush.msra.mxu0 %v204
    %245 = vmatpush.msra.mxu0 %v203
    %246 = vmatpush.msra.mxu0 %v202
    %247 = vmatpush.msra.mxu0 %v201
    %248 = vmatpush.msra.mxu0 %v200
    %249 = vmatpush.msra.mxu0 %v199
    %250 = vmatpush.msra.mxu0 %v198
    %251 = vmatpush.msra.mxu0 %v197
    %252 = vmatmul.f32.gmra.mxu0 %v22
    %v253 = vpop.f32.mrf.mxu0
    %v254 = vadd.f32 %v231, %v253
    %255 = vmatmul.f32.gmra.mxu0 %v24
    %v256 = vpop.f32.mrf.mxu0
    %v257 = vadd.f32 %v234, %v256
    %258 = vdwg.mxu0
    %vm259 = vcmask 261120
    %v261 = vsel %vm259, %v98, 0
    %v264 = vsel %vm259, %v101, 0
    %v267 = vsel %vm259, %v176, 0
    %v270 = vsel %vm259, %v179, 0
    %272 = vmatpush.xpose.msra.mxu0 0.0
    %273 = vmatpush.xpose.msra.mxu0 0.0
    %274 = vmatpush.xpose.msra.mxu0 0.0
    %275 = vmatpush.xpose.msra.mxu0 0.0
    %276 = vmatpush.xpose.msra.mxu0 0.0
    %277 = vmatpush.xpose.msra.mxu0 0.0
    %278 = vmatpush.xpose.msra.mxu0 0.0
    %279 = vmatpush.xpose.msra.mxu0 0.0
    %280 = vmatpush.xpose.msra.mxu0 0.0
    %281 = vmatpush.xpose.msra.mxu0 0.0
    %282 = vmatpush.xpose.msra.mxu0 0.0
    %283 = vmatpush.xpose.msra.mxu0 0.0
    %284 = vmatpush.xpose.msra.mxu0 0.0
    %285 = vmatpush.xpose.msra.mxu0 0.0
    %286 = vmatpush.xpose.msra.mxu0 %v270
    %287 = vmatpush.xpose.msra.mxu0 %v267
    %288 = vmatmul.f32.gmra.mxu0 %v261
    %v289 = vpop.f32.mrf.mxu0
    %v290 = vadd.f32 0.0, %v289
    %291 = vmatmul.f32.gmra.mxu0 %v264
    %v292 = vpop.f32.mrf.mxu0
    %v293 = vadd.f32 0.0, %v292
    %294 = vdwg.mxu0
    %v295 = vmul.f32 %v290, 0.17677669
    %v296 = vmul.f32 %v293, 0.17677669
    %v297 = vld [vmem:[%s4] sm:$0xff]
    %v298 = vld [vmem:[%s4 + $0x8] sm:$0xff]
    %v299 = vadd.f32 %v295, %v297
    %v300 = vadd.f32 %v296, %v298
    %vm301 = vcmask 130048
    %v302 = vsel %vm301, %v299, -inf
    %303 = vmax.xlane.f32.xlu0 %v302
    %v304 = vpop.xlane.xlu0 %303
    %v305 = vsel %vm301, %v300, -inf
    %306 = vmax.xlane.f32.xlu0 %v305
    %v307 = vpop.xlane.xlu0 %306
    %v308 = vsub.f32 %v299, %v304
    %v309 = vsub.f32 %v300, %v307
    %v310 = vmul.f32 %v308, 1.442695
    %v311 = vpow.pop %v310
    %v312 = vmul.f32 %v309, 1.442695
    %v313 = vpow.pop %v312
    %v314 = vsel %vm301, %v311, 0.0
    %315 = vadd.xlane.f32.xlu0 %v314
    %v316 = vpop.xlane.xlu0 %315
    %v317 = vsel %vm301, %v313, 0.0
    %318 = vadd.xlane.f32.xlu0 %v317
    %v319 = vpop.xlane.xlu0 %318
    %v320 = vrcp.pop %v316
    %v321 = vmul.f32 %v316, %v320
    %v322 = vsub.f32 1.0, %v321
    %v323 = vmul.f32 %v320, %v322
    %v324 = vadd.f32 %v320, %v323
    %vm325 = vweird.f32 %v316
    %vm326 = vweird.f32 %v320
    %vm327 = vmor %vm325, %vm326
    %v328 = vsel %vm327, %v320, %v324
    %v329 = vand.u32 2147483647, %v316
    %vm330 = vcmp.eq.f32.partialorder %v329, 8.507059e+37
    %v331 = vand.u32 %v316, 2147483648
    %v332 = vor.u32 1.1754944e-38, %v331
    %v333 = vsel %vm330, %v332, %v328
    %v334 = vmul.f32 %v311, %v333
    %v335 = vrcp.pop %v319
    %v336 = vmul.f32 %v319, %v335
    %v337 = vsub.f32 1.0, %v336
    %v338 = vmul.f32 %v335, %v337
    %v339 = vadd.f32 %v335, %v338
    %vm340 = vweird.f32 %v319
    %vm341 = vweird.f32 %v335
    %vm342 = vmor %vm340, %vm341
    %v343 = vsel %vm342, %v335, %v339
    %v344 = vand.u32 2147483647, %v319
    %vm345 = vcmp.eq.f32.partialorder %v344, 8.507059e+37
    %v346 = vand.u32 %v319, 2147483648
    %v347 = vor.u32 1.1754944e-38, %v346
    %v348 = vsel %vm345, %v347, %v343
    %v349 = vmul.f32 %v313, %v348
    %v351 = vsel %vm301, %v334, 0
    %v354 = vsel %vm301, %v349, 0
    %356 = vmatpush.msra.mxu0 0.0
    %357 = vmatpush.msra.mxu0 0.0
    %358 = vmatpush.msra.mxu0 0.0
    %359 = vmatpush.msra.mxu0 0.0
    %360 = vmatpush.msra.mxu0 0.0
    %361 = vmatpush.msra.mxu0 0.0
    %362 = vmatpush.msra.mxu0 0.0
    %363 = vmatpush.msra.mxu0 0.0
    %364 = vmatpush.msra.mxu0 0.0
    %365 = vmatpush.msra.mxu0 0.0
    %366 = vmatpush.msra.mxu0 0.0
    %367 = vmatpush.msra.mxu0 0.0
    %368 = vmatpush.msra.mxu0 0.0
    %369 = vmatpush.msra.mxu0 0.0
    %370 = vmatpush.msra.mxu0 %v257
    %371 = vmatpush.msra.mxu0 %v254
    %372 = vmatmul.f32.gmra.mxu0 %v351
    %v373 = vpop.f32.mrf.mxu0
    %v374 = vadd.f32 0.0, %v373
    %375 = vmatmul.f32.gmra.mxu0 %v354
    %v376 = vpop.f32.mrf.mxu0
    %v377 = vadd.f32 0.0, %v376
    %378 = vdwg.mxu0
    %379 = vst.msk [vmem:[#allocation2] sm:$0xff] %vm259, %v374
    %380 = vst.msk [vmem:[#allocation2 + $0x8] sm:$0xff] %vm259, %v377
    // Predicated region
    $region22: #{tpu_custom_call.1} parent=1 // pred_check
      _
    $region23: #{tpu_custom_call.1} parent=1 // pred_check_branch
      %382 = sbr.rel (0) target = $region25
    $region24: #{tpu_custom_call.1} parent=1 // pred_region
      %384 = vsyncadd [#allocation3], 0
      %s385 = sshll.u32 [#allocation2], 4
      %s386 = int_to_ptr.vmem [resolvable:$true] %s385
      %s387 = sshll.u32 %s5, 4
      %s388 = int_to_ptr.hbm [resolvable:$true] %s387
      %393 = dma.vmem_to_hbm [thread:$0]  %s386, 256, %s388, [#allocation3], 128, 128, 8
    $region25: #{tpu_custom_call.1} parent=1 // pred_fallthru
      _
    // Predicated region
    $region26: #{tpu_custom_call.1} parent=1 // pred_check
      _
    $region27: #{tpu_custom_call.1} parent=1 // pred_check_branch
      %395 = sbr.rel (0) target = $region29
    $region28: #{tpu_custom_call.1} parent=1 // pred_region
      %397 = dma.done [#allocation3], 256
    $region29: #{tpu_custom_call.1} parent=1 // pred_fallthru
      _
    %398 = vsyncpa [#allocation3], 1

</llo_original>
